<compile_context>
chip_gen: v5e
topology: v5e:2x2
jax: 0.10.0
libtpu: 0.0.40
codegen_flags: <defaults>
</compile_context>

<pallas_src>
import jax
import jax.numpy as jnp
from jax.experimental import pallas as pl
from jax.experimental.pallas import tpu as pltpu


def _round_up(v, m):
    return (v + m - 1) // m * m


def _vmem_capacity_bytes():
    try:
        return int(pltpu.get_tpu_info().vmem_capacity_bytes)
    except Exception:
        return 64 * 1024 * 1024  # conservative fallback (v7x per-core VMEM)


# ---------------------------------------------------------------------------
# Kernel
# ---------------------------------------------------------------------------
def _mlp_kernel(x_ref, wg_ref, wu_ref, w2_ref, o_ref, acc_ref):
    # x_ref  : (tm, H)   token tile
    # wg_ref : (H, ti)   gate half of W1^T, intermediate-tile k
    # wu_ref : (H, ti)   up   half of W1^T, intermediate-tile k
    # w2_ref : (ti, H)   W2^T, intermediate-tile k
    # o_ref  : (tm, H)
    # acc_ref: (tm, H)   f32 accumulator, resident across the k axis
    k = pl.program_id(1)

    @pl.when(k == 0)
    def _init():
        acc_ref[...] = jnp.zeros_like(acc_ref)

    x = x_ref[...]

    # fc1 (two halves), f32 accumulation on the MXU.
    gate = jnp.dot(x, wg_ref[...], preferred_element_type=jnp.float32)
    up = jnp.dot(x, wu_ref[...], preferred_element_type=jnp.float32)

    # swiglu in f32: up * silu(gate)
    act = up * (gate * jax.nn.sigmoid(gate))

    # fc2 partial for this intermediate tile -> f32 scratch accumulator.
    acc_ref[...] += jnp.dot(act.astype(w2_ref.dtype), w2_ref[...],
                            preferred_element_type=jnp.float32)

    @pl.when(k == pl.num_programs(1) - 1)
    def _finalize():
        o_ref[...] = acc_ref[...].astype(o_ref.dtype)


# ---------------------------------------------------------------------------
# One-time weight preparation (call at model-load time, NOT per forward).
# ---------------------------------------------------------------------------
def prepare_mlp_weights(w1, w2, *, compute_dtype=jnp.bfloat16, ti=None):
    """Split / transpose / cast / pad fc1 & fc2 weights once.

    w1 : (2*I, H)  fc1.weight  (PyTorch Linear layout [out, in])
    w2 : (H, I)    fc2.weight
    Returns (wg, wu, w2t, ti): wg/wu (H, I_pad), w2t (I_pad, H).
    """
    twoI, H = w1.shape
    I = twoI // 2
    assert w1.shape == (2 * I, H) and w2.shape == (H, I)

    wg = w1[:I].T           # (H, I)  gate half (first chunk, as in torch .chunk)
    wu = w1[I:].T           # (H, I)  up half
    w2t = w2.T              # (I, H)
    if compute_dtype is not None:
        wg = wg.astype(compute_dtype)
        wu = wu.astype(compute_dtype)
        w2t = w2t.astype(compute_dtype)
    bpe = jnp.dtype(wg.dtype).itemsize

    if ti is None:
        # Keep all weights VMEM-resident (loaded once per kernel call) when small.
        resident_budget = min(24 << 20, _vmem_capacity_bytes() // 3)
        ti = I if 3 * H * I * bpe <= resident_budget else 512
    ti = min(ti, I)

    if ti < I:
        ti = max(128, (ti // 128) * 128)           # lane-aligned streaming tile
        I_pad = _round_up(I, ti)
        if I_pad != I:
            # Zero-padded intermediate channels contribute exactly 0 to the output.
            wg = jnp.pad(wg, ((0, 0), (0, I_pad - I)))
            wu = jnp.pad(wu, ((0, 0), (0, I_pad - I)))
            w2t = jnp.pad(w2t, ((0, I_pad - I), (0, 0)))
    else:
        ti = I
    return wg, wu, w2t, ti


# ---------------------------------------------------------------------------
# Forward
# ---------------------------------------------------------------------------
def mlp_forward(x, wg, wu, w2t, *, ti=None, tm=None, out_dtype=None,
                vmem_limit_bytes=None):
    """SwiGLU MLP forward with pre-prepared weights.

    x   : (tokens, H)   activations (any float dtype; output keeps this dtype)
    wg  : (H, I_pad)    gate half of fc1 weight (pre-transposed / cast / padded)
    wu  : (H, I_pad)    up   half of fc1 weight
    w2t : (I_pad, H)    fc2 weight (pre-transposed)
    """
    M, H = x.shape
    Ipad = w2t.shape[0]
    assert wg.shape == (H, Ipad) and wu.shape == (H, Ipad) and w2t.shape == (Ipad, H)

    orig_dtype = x.dtype                      # preserve caller dtype for output
    out_dtype = out_dtype if out_dtype is not None else orig_dtype
    compute_dtype = wg.dtype
    if x.dtype != compute_dtype:
        x = x.astype(compute_dtype)           # fast-MXU operands (bf16 default)
    bpe = jnp.dtype(compute_dtype).itemsize
    sub = {4: 8, 2: 16, 1: 32}.get(bpe, 8)    # sublane multiple for this dtype

    vmem_cap = _vmem_capacity_bytes()
    budget = max(vmem_cap - (12 << 20), 16 << 20)   # leave headroom for the compiler

    if ti is None:
        ti = Ipad if 3 * H * Ipad * bpe <= min(24 << 20, vmem_cap // 3) else 512
    ti = min(ti, Ipad)
    assert ti == Ipad or (Ipad % ti == 0 and ti % 128 == 0), (
        "intermediate dim must be pre-padded to a multiple of ti "
        "(use prepare_mlp_weights)")

    def footprint(tm_, ti_):
        blocks = 2 * (2 * tm_ * H + 3 * H * ti_) * bpe   # double-buffered in/out blocks
        acc = tm_ * H * 4                                # f32 accumulator scratch
        temps = (3 * 4 + bpe) * tm_ * ti_                # gate/up/act f32 + act cast
        return blocks + acc + temps

    m_cap = _round_up(M, sub)
    if tm is None:
        tm = next((t for t in (1024, 512, 256, 128)
                   if t <= m_cap and footprint(t, ti) <= budget), None)
        if tm is None:
            tm = min(m_cap, 128)
        # Small-M: split tokens so both v7x TensorCores get work on the parallel axis.
        if pl.cdiv(M, tm) == 1 and M > sub:
            tm = min(tm, _round_up(pl.cdiv(M, 2), sub))
    tm = min(tm, m_cap)
    assert tm % sub == 0

    grid = (pl.cdiv(M, tm), Ipad // ti)       # ragged M: partial last block, no x copy

    need = footprint(tm, ti)
    if vmem_limit_bytes is None:
        vmem_limit_bytes = int(min(max(int(need * 1.2) + (4 << 20), 32 << 20),
                                   vmem_cap - (8 << 20)))

    weight_bytes = 3 * H * Ipad * bpe
    cost = pl.CostEstimate(
        flops=6 * M * H * Ipad,                         # 2*M*H*2I (fc1) + 2*M*I*H (fc2)
        transcendentals=2 * M * Ipad,                   # sigmoid ~ exp + reciprocal
        bytes_accessed=int(M * H * bpe
                           + M * H * jnp.dtype(out_dtype).itemsize
                           + (weight_bytes if ti == Ipad else weight_bytes * grid[0])),
    )

    out = pl.pallas_call(
        _mlp_kernel,
        out_shape=jax.ShapeDtypeStruct((M, H), out_dtype),
        grid_spec=pltpu.PrefetchScalarGridSpec(
            num_scalar_prefetch=0,
            grid=grid,
            in_specs=[
                pl.BlockSpec((tm, H), lambda i, k: (i, 0)),    # token tile
                pl.BlockSpec((H, ti), lambda i, k: (0, k)),    # W1 gate half
                pl.BlockSpec((H, ti), lambda i, k: (0, k)),    # W1 up half
                pl.BlockSpec((ti, H), lambda i, k: (k, 0)),    # W2
            ],
            out_specs=pl.BlockSpec((tm, H), lambda i, k: (i, 0)),
            scratch_shapes=[pltpu.VMEM((tm, H), jnp.float32)],
        ),
        compiler_params=pltpu.CompilerParams(
            dimension_semantics=("parallel", "arbitrary"),
            vmem_limit_bytes=vmem_limit_bytes,
        ),
        cost_estimate=cost,
    )(x, wg, wu, w2t)
    # TODO(synk): optional fp8 (v7x) / int8 (v6e) weight streaming with per-channel
    # scales for bandwidth-bound shapes.
    return out


def reference_mlp(x, w1, w2):
    """Pure-JAX reference with PyTorch-layout weights."""
    y = x @ w1.T
    I = w2.shape[1]
    gate, up = y[:, :I], y[:, I:]
    return (up * jax.nn.silu(gate)) @ w2.T


if __name__ == "__main__":
    # Small config consistent with the module: hidden_size=128, intermediate=256,
    # batch=2, seq=8 -> 16 tokens.
    batch, seq, hidden, inter = 2, 8, 128, 256

    key = jax.random.PRNGKey(0)
    kx, k1, k2 = jax.random.split(key, 3)

    # Deterministic init mimicking nn.Linear's uniform(-1/sqrt(fan_in), ...),
    # in PyTorch Linear layout: fc1.weight (2I, H), fc2.weight (H, I).
    w1 = jax.random.uniform(k1, (2 * inter, hidden), jnp.float32,
                            minval=-1.0 / hidden ** 0.5, maxval=1.0 / hidden ** 0.5)
    w2 = jax.random.uniform(k2, (hidden, inter), jnp.float32,
                            minval=-1.0 / inter ** 0.5, maxval=1.0 / inter ** 0.5)

    hidden_states = jax.random.normal(kx, (batch, seq, hidden), jnp.float32)
    x = hidden_states.reshape(batch * seq, hidden)

    ref = reference_mlp(x, w1, w2)

    # f32 operand path: strict correctness check against the pure-JAX reference.
    wg32, wu32, w2t32, ti32 = prepare_mlp_weights(w1, w2, compute_dtype=None)
    out_f32 = jax.block_until_ready(mlp_forward(x, wg32, wu32, w2t32, ti=ti32))
    assert out_f32.shape == (batch * seq, hidden)
    assert out_f32.dtype == x.dtype
    assert jnp.allclose(out_f32, ref, atol=1e-4, rtol=1e-4), "f32 mismatch vs reference"

    # Default bf16 fast-MXU path (weights prepared once); output dtype preserved (f32).
    wg, wu, w2t, ti = prepare_mlp_weights(w1, w2)          # bf16 by default
    out_bf16 = jax.block_until_ready(mlp_forward(x, wg, wu, w2t, ti=ti))
    assert out_bf16.shape == (batch * seq, hidden)
    assert out_bf16.dtype == x.dtype                       # caller dtype preserved
    assert bool(jnp.all(jnp.isfinite(out_bf16)))
    assert jnp.allclose(out_bf16, ref, atol=1e-1, rtol=1e-1), "bf16 mismatch vs reference"

    # Reshape back to (batch, seq, hidden) as the module would return.
    out = out_bf16.reshape(batch, seq, hidden)
    jax.block_until_ready(out)
    print("KERNEL_OK")
</pallas_src>

<mosaic_0001>
module attributes {stable_mosaic.version = 11 : i64} {
  func.func @_mlp_kernel(%arg0: i32, %arg1: i32, %arg2: memref<8x128xf32, #tpu.memory_space<vmem>>, %arg3: memref<128x256xf32, #tpu.memory_space<vmem>>, %arg4: memref<128x256xf32, #tpu.memory_space<vmem>>, %arg5: memref<256x128xf32, #tpu.memory_space<vmem>>, %arg6: memref<8x128xf32, #tpu.memory_space<vmem>>, %arg7: memref<8x128xf32, #tpu.memory_space<vmem>>) attributes {dimension_semantics = [#tpu.dimension_semantics<parallel>, #tpu.dimension_semantics<arbitrary>], iteration_bounds = array<i64: 2, 1>, scalar_prefetch = 0 : i64, scratch_operands = 1 : i64, tpu.core_type = #tpu.core_type<tc>, window_params = [{transform_indices = @transform_0, window_bounds = array<i64: 8, 128>}, {transform_indices = @transform_1, window_bounds = array<i64: 128, 256>}, {transform_indices = @transform_2, window_bounds = array<i64: 128, 256>}, {transform_indices = @transform_3, window_bounds = array<i64: 256, 128>}, {transform_indices = @transform_4, window_bounds = array<i64: 8, 128>}]} {
    %c0_i32 = arith.constant 0 : i32
    %0 = arith.cmpi eq, %arg1, %c0_i32 : i32
    %1 = arith.extui %0 : i1 to i32
    %c0_i32_0 = arith.constant 0 : i32
    %2 = arith.cmpi ne, %1, %c0_i32_0 : i32
    scf.if %2 {
      %cst_17 = arith.constant 0.000000e+00 : f32
      %23 = vector.broadcast %cst_17 : f32 to vector<8x128xf32>
      %c0_18 = arith.constant 0 : index
      %c0_19 = arith.constant 0 : index
      %24 = vector.load %arg7[%c0_18, %c0_19] : memref<8x128xf32, #tpu.memory_space<vmem>>, vector<8x128xf32>
      tpu.vector_store %arg7[%c0_18, %c0_19], %23 {strides = array<i32>} : memref<8x128xf32, #tpu.memory_space<vmem>>, vector<8x128xf32>,
    } else {
    }
    %c0 = arith.constant 0 : index
    %c0_1 = arith.constant 0 : index
    %3 = vector.load %arg2[%c0, %c0_1] : memref<8x128xf32, #tpu.memory_space<vmem>>, vector<8x128xf32>
    %c0_2 = arith.constant 0 : index
    %c0_3 = arith.constant 0 : index
    %4 = vector.load %arg3[%c0_2, %c0_3] : memref<128x256xf32, #tpu.memory_space<vmem>>, vector<128x256xf32>
    %cst = arith.constant dense<0.000000e+00> : vector<8x256xf32>
    %5 = tpu.matmul %3, %4, %cst {dimension_numbers = #tpu.dot_dimension_numbers<[1], [0], [0], [1], [0, 0, 1, 1], [], []>} : vector<8x128xf32>, vector<128x256xf32>, vector<8x256xf32> -> vector<8x256xf32>
    %c0_4 = arith.constant 0 : index
    %c0_5 = arith.constant 0 : index
    %6 = vector.load %arg4[%c0_4, %c0_5] : memref<128x256xf32, #tpu.memory_space<vmem>>, vector<128x256xf32>
    %cst_6 = arith.constant dense<0.000000e+00> : vector<8x256xf32>
    %7 = tpu.matmul %3, %6, %cst_6 {dimension_numbers = #tpu.dot_dimension_numbers<[1], [0], [0], [1], [0, 0, 1, 1], [], []>} : vector<8x128xf32>, vector<128x256xf32>, vector<8x256xf32> -> vector<8x256xf32>
    %8 = arith.negf %5 : vector<8x256xf32>
    %9 = math.exp %8 : vector<8x256xf32>
    %cst_7 = arith.constant 1.000000e+00 : f32
    %10 = vector.broadcast %cst_7 : f32 to vector<8x256xf32>
    %11 = arith.addf %10, %9 : vector<8x256xf32>
    %12 = arith.divf %10, %11 : vector<8x256xf32>
    %13 = arith.mulf %5, %12 : vector<8x256xf32>
    %14 = arith.mulf %7, %13 : vector<8x256xf32>
    %c0_8 = arith.constant 0 : index
    %c0_9 = arith.constant 0 : index
    %15 = vector.load %arg7[%c0_8, %c0_9] : memref<8x128xf32, #tpu.memory_space<vmem>>, vector<8x128xf32>
    %c0_10 = arith.constant 0 : index
    %c0_11 = arith.constant 0 : index
    %16 = vector.load %arg5[%c0_10, %c0_11] : memref<256x128xf32, #tpu.memory_space<vmem>>, vector<256x128xf32>
    %cst_12 = arith.constant dense<0.000000e+00> : vector<8x128xf32>
    %17 = tpu.matmul %14, %16, %cst_12 {dimension_numbers = #tpu.dot_dimension_numbers<[1], [0], [0], [1], [0, 0, 1, 1], [], []>} : vector<8x256xf32>, vector<256x128xf32>, vector<8x128xf32> -> vector<8x128xf32>
    %18 = arith.addf %15, %17 : vector<8x128xf32>
    %c0_13 = arith.constant 0 : index
    %c0_14 = arith.constant 0 : index
    %19 = vector.load %arg7[%c0_13, %c0_14] : memref<8x128xf32, #tpu.memory_space<vmem>>, vector<8x128xf32>
    tpu.vector_store %arg7[%c0_13, %c0_14], %18 {strides = array<i32>} : memref<8x128xf32, #tpu.memory_space<vmem>>, vector<8x128xf32>,
    %c0_i32_15 = arith.constant 0 : i32
    %20 = arith.cmpi eq, %arg1, %c0_i32_15 : i32
    %21 = arith.extui %20 : i1 to i32
    %c0_i32_16 = arith.constant 0 : i32
    %22 = arith.cmpi ne, %21, %c0_i32_16 : i32
    scf.if %22 {
      %c0_17 = arith.constant 0 : index
      %c0_18 = arith.constant 0 : index
      %23 = vector.load %arg7[%c0_17, %c0_18] : memref<8x128xf32, #tpu.memory_space<vmem>>, vector<8x128xf32>
      %c0_19 = arith.constant 0 : index
      %c0_20 = arith.constant 0 : index
      %24 = vector.load %arg6[%c0_19, %c0_20] : memref<8x128xf32, #tpu.memory_space<vmem>>, vector<8x128xf32>
      tpu.vector_store %arg6[%c0_19, %c0_20], %23 {strides = array<i32>} : memref<8x128xf32, #tpu.memory_space<vmem>>, vector<8x128xf32>,
    } else {
    }
    return
  }
  func.func @transform_0(%arg0: i32, %arg1: i32) -> (i32, i32) {
    %c0_i32 = arith.constant 0 : i32
    %c0_i32_0 = arith.constant 0 : i32
    return %arg0, %c0_i32 : i32, i32
  }
  func.func @transform_1(%arg0: i32, %arg1: i32) -> (i32, i32) {
    %c0_i32 = arith.constant 0 : i32
    %c0_i32_0 = arith.constant 0 : i32
    return %c0_i32, %arg1 : i32, i32
  }
  func.func @transform_2(%arg0: i32, %arg1: i32) -> (i32, i32) {
    %c0_i32 = arith.constant 0 : i32
    %c0_i32_0 = arith.constant 0 : i32
    return %c0_i32, %arg1 : i32, i32
  }
  func.func @transform_3(%arg0: i32, %arg1: i32) -> (i32, i32) {
    %c0_i32 = arith.constant 0 : i32
    %c0_i32_0 = arith.constant 0 : i32
    return %arg1, %c0_i32 : i32, i32
  }
  func.func @transform_4(%arg0: i32, %arg1: i32) -> (i32, i32) {
    %c0_i32 = arith.constant 0 : i32
    %c0_i32_0 = arith.constant 0 : i32
    return %arg0, %c0_i32 : i32, i32
  }
}

</mosaic_0001>

<llo_original>
// kernel: tpu_custom_call.1
$region0: #{tpu_custom_call.1}
  #allocation0 [shape = 'u32[]', space=smem, size = 0x4, offset = 0x4, fixed_abs, tag = 'smem constant byte address 0x4 - core index']
  #allocation1 [shape = 'u32[72,128]{1,0:T(1,128)}', space=vmem, size = 0x9000, scoped, tag = 'internal scratch']
  #allocation2 [shape = 'f32[8,128]{1,0:T(8,128)}', space=vmem, size = 0x1000, scoped, tag = 'scratch operand']
  %s0 = inlined_call_operand.hbm [shape: f32[16,128], index: 0, kind: input, shape index: {}]
  %s1 = inlined_call_operand.hbm [shape: f32[128,256], index: 1, kind: input, shape index: {}]
  %s2 = inlined_call_operand.hbm [shape: f32[128,256], index: 2, kind: input, shape index: {}]
  %s3 = inlined_call_operand.hbm [shape: f32[256,128], index: 3, kind: input, shape index: {}]
  %s4 = inlined_call_operand.hbm [shape: f32[16,128], index: 4, kind: output, shape index: {}]
  %s5 = sld [smem:[#allocation0]]
  $region73: #{tpu_custom_call.1} parent=0
    _
  %s7 = ssub.s32 1, %s5
  %s8 = scalar_select 0, %s7, %s5
  $region1: #{tpu_custom_call.1} parent=0
    #allocation3 [shape = 'u8[8192]{0}', space=vmem, size = 0x2000, scoped, tag = 'input window, operand 0']
    #allocation4 [shape = 's32[2]{0}', space=sflag, size = 0x8, scoped, tag = 'scoped memory for tpu_custom_call.1']
    #allocation5 [shape = 's32[2]{0}', space=sflag, size = 0x8, scoped, tag = 'scoped memory for tpu_custom_call.1']
    #allocation6 [shape = 'u8[131072]{0}', space=vmem, size = 0x20000, scoped, tag = 'input window, operand 1, single buffered']
    #allocation7 [shape = 's32[1]{0}', space=sflag, size = 0x4, scoped, tag = 'scoped memory for tpu_custom_call.1']
    #allocation8 [shape = 'u8[131072]{0}', space=vmem, size = 0x20000, scoped, tag = 'input window, operand 2, single buffered']
    #allocation9 [shape = 'u8[131072]{0}', space=vmem, size = 0x20000, scoped, tag = 'input window, operand 3, single buffered']
    #allocation10 [shape = 's32[1]{0}', space=sflag, size = 0x4, scoped, tag = 'scoped memory for tpu_custom_call.1']
    #allocation11 [shape = 'u8[8192]{0}', space=vmem, size = 0x2000, scoped, tag = 'output window, operand 0']
    %9 = vsyncpa [#allocation4], 0
    %s10 = scalar_lea.sflag [#allocation4], 1
    %11 = vsyncpa %s10, 0
    %12 = vsyncpa [#allocation7], 0
    %13 = vsyncpa [#allocation10], 0
    %14 = vsyncpa [#allocation5], 0
    %s15 = scalar_lea.sflag [#allocation5], 1
    %16 = vsyncpa %s15, 0
    loop: start=0, step=1, limit=4
    $region2: #{tpu_custom_call.1} parent=1 // loop_pre_header
      _
    $region3: #{tpu_custom_call.1} parent=1 // loop_header
      %s18 = sphi 0, %s22
      %p19 = scmp.ge.s32.totalorder %s18, 4
      %s25 = sphi 0, %s37
      %s26 = sphi 0, %s33
      %s27 = sphi 0, %s25
      %s28 = sphi 0, %s26
      %s29 = sphi 0, %s27
      %s30 = sphi 0, %s28
      %s40 = sphi 0, %s42
      %s43 = sphi 0, %s40
      %s44 = sphi 0, %s43
      %s60 = sphi 0, %s44
      %s66 = sphi 0, %s68
      %s69 = sphi 0, %s66
      %s70 = sphi 0, %s69
      %s86 = sphi 0, %s70
      %s92 = sphi 0, %s94
      %s95 = sphi 0, %s92
      %s96 = sphi 0, %s95
      %s112 = sphi 0, %s96
      %s118 = sphi 0, %s120
      %s121 = sphi 0, %s118
      %s122 = sphi 0, %s121
      %s138 = sphi 0, %s122
      %s144 = sphi 0, %s146
      %s147 = sphi 0, %s144
      %s148 = sphi 0, %s147
      %s164 = sphi 0, %s148
    $region4: #{tpu_custom_call.1} parent=1 // loop_header_branch
      %21 = sbr.rel (%p19) target = $region8
    $region5: #{tpu_custom_call.1} parent=1 // loop_body
      %s23 = ssub.s32 %s18, 1
      %s24 = ssub.s32 %s18, 2
      %s31 = sadd.s32 1, %s26
      %p32 = scmp.ge.s32.totalorder %s31, 1
      %s33 = scalar_select %p32, 0, %s31
      %s34 = sadd.s32 1, %s25
      %s35 = scalar_select %p32, %s34, %s25
      %p36 = scmp.ge.s32.totalorder %s35, 2
      %s37 = scalar_select %p36, 0, %s35
      %s38 = ssub.s32 %s25, %s37
      %p39 = scmp.eq.s32.totalorder %s38, 0
      %s41 = sadd.s32 %s40, 1
      %s42 = scalar_select %p39, %s40, %s41
      %p45 = pneg %p39
      %p46 = scmp.eq.s32.totalorder %s18, 1
      %p47 = por %p45, %p46
      %p48 = scmp.ne.s32.totalorder %s40, %s43
      %p49 = scmp.eq.s32.totalorder %s18, 0
      %p50 = por %p48, %p49
      %p51 = scmp.ne.s32.totalorder %s40, %s43
      %p52 = scmp.eq.s32.totalorder %s23, 1
      %p53 = por %p51, %p52
      %p54 = scmp.ne.s32.totalorder %s43, %s44
      %p55 = scmp.eq.s32.totalorder %s23, 0
      %p56 = por %p54, %p55
      %p57 = scmp.ne.s32.totalorder %s43, %s44
      %p58 = scmp.eq.s32.totalorder %s24, 1
      %p59 = por %p57, %p58
      %p61 = scmp.ne.s32.totalorder %s44, %s60
      %p62 = scmp.eq.s32.totalorder %s24, 0
      %p63 = por %p61, %p62
      %s64 = ssub.s32 %s26, %s33
      %p65 = scmp.eq.s32.totalorder %s64, 0
      %s67 = sadd.s32 %s66, 1
      %s68 = scalar_select %p65, %s66, %s67
      %p71 = pneg %p65
      %p72 = scmp.eq.s32.totalorder %s18, 1
      %p73 = por %p71, %p72
      %p74 = scmp.ne.s32.totalorder %s66, %s69
      %p75 = scmp.eq.s32.totalorder %s18, 0
      %p76 = por %p74, %p75
      %p77 = scmp.ne.s32.totalorder %s66, %s69
      %p78 = scmp.eq.s32.totalorder %s23, 1
      %p79 = por %p77, %p78
      %p80 = scmp.ne.s32.totalorder %s69, %s70
      %p81 = scmp.eq.s32.totalorder %s23, 0
      %p82 = por %p80, %p81
      %p83 = scmp.ne.s32.totalorder %s69, %s70
      %p84 = scmp.eq.s32.totalorder %s24, 1
      %p85 = por %p83, %p84
      %p87 = scmp.ne.s32.totalorder %s70, %s86
      %p88 = scmp.eq.s32.totalorder %s24, 0
      %p89 = por %p87, %p88
      %s90 = ssub.s32 %s26, %s33
      %p91 = scmp.eq.s32.totalorder %s90, 0
      %s93 = sadd.s32 %s92, 1
      %s94 = scalar_select %p91, %s92, %s93
      %p97 = pneg %p91
      %p98 = scmp.eq.s32.totalorder %s18, 1
      %p99 = por %p97, %p98
      %p100 = scmp.ne.s32.totalorder %s92, %s95
      %p101 = scmp.eq.s32.totalorder %s18, 0
      %p102 = por %p100, %p101
      %p103 = scmp.ne.s32.totalorder %s92, %s95
      %p104 = scmp.eq.s32.totalorder %s23, 1
      %p105 = por %p103, %p104
      %p106 = scmp.ne.s32.totalorder %s95, %s96
      %p107 = scmp.eq.s32.totalorder %s23, 0
      %p108 = por %p106, %p107
      %p109 = scmp.ne.s32.totalorder %s95, %s96
      %p110 = scmp.eq.s32.totalorder %s24, 1
      %p111 = por %p109, %p110
      %p113 = scmp.ne.s32.totalorder %s96, %s112
      %p114 = scmp.eq.s32.totalorder %s24, 0
      %p115 = por %p113, %p114
      %s116 = ssub.s32 %s26, %s33
      %p117 = scmp.eq.s32.totalorder %s116, 0
      %s119 = sadd.s32 %s118, 1
      %s120 = scalar_select %p117, %s118, %s119
      %p123 = pneg %p117
      %p124 = scmp.eq.s32.totalorder %s18, 1
      %p125 = por %p123, %p124
      %p126 = scmp.ne.s32.totalorder %s118, %s121
      %p127 = scmp.eq.s32.totalorder %s18, 0
      %p128 = por %p126, %p127
      %p129 = scmp.ne.s32.totalorder %s118, %s121
      %p130 = scmp.eq.s32.totalorder %s23, 1
      %p131 = por %p129, %p130
      %p132 = scmp.ne.s32.totalorder %s121, %s122
      %p133 = scmp.eq.s32.totalorder %s23, 0
      %p134 = por %p132, %p133
      %p135 = scmp.ne.s32.totalorder %s121, %s122
      %p136 = scmp.eq.s32.totalorder %s24, 1
      %p137 = por %p135, %p136
      %p139 = scmp.ne.s32.totalorder %s122, %s138
      %p140 = scmp.eq.s32.totalorder %s24, 0
      %p141 = por %p139, %p140
      %s142 = ssub.s32 %s25, %s37
      %p143 = scmp.eq.s32.totalorder %s142, 0
      %s145 = sadd.s32 %s144, 1
      %s146 = scalar_select %p143, %s144, %s145
      %p149 = pneg %p143
      %p150 = scmp.eq.s32.totalorder %s18, 1
      %p151 = por %p149, %p150
      %p152 = scmp.ne.s32.totalorder %s144, %s147
      %p153 = scmp.eq.s32.totalorder %s18, 0
      %p154 = por %p152, %p153
      %p155 = scmp.ne.s32.totalorder %s144, %s147
      %p156 = scmp.eq.s32.totalorder %s23, 1
      %p157 = por %p155, %p156
      %p158 = scmp.ne.s32.totalorder %s147, %s148
      %p159 = scmp.eq.s32.totalorder %s23, 0
      %p160 = por %p158, %p159
      %p161 = scmp.ne.s32.totalorder %s147, %s148
      %p162 = scmp.eq.s32.totalorder %s24, 1
      %p163 = por %p161, %p162
      %p165 = scmp.ne.s32.totalorder %s148, %s164
      %p166 = scmp.eq.s32.totalorder %s24, 0
      %p167 = por %p165, %p166
      %p168 = scmp.le.s32.totalorder 1, %s18
      %p169 = scmp.lt.s32.totalorder %s18, 3
      %p170 = pnand %p168, %p169
      %p171 = pneg %p170
      // Predicated region
      $region9: #{tpu_custom_call.1} parent=5 // pred_check
        _
      $region10: #{tpu_custom_call.1} parent=5 // pred_check_branch
        %173 = sbr.rel (%p170) target = $region12
      $region11: #{tpu_custom_call.1} parent=5 // pred_region
        %s174 = ssub.s32 %s18, 1
        // Predicated region
        $region13: #{tpu_custom_call.1} parent=11 // pred_check
          %p175 = pneg %p82
        $region14: #{tpu_custom_call.1} parent=11 // pred_check_branch
          %177 = sbr.rel (%p175) target = $region16
        $region15: #{tpu_custom_call.1} parent=11 // pred_region
          %s178 = smul.u32 2, %s28
          %180 = vsyncadd [#allocation7], 0
          %s181 = smul.addr %s178, 8
          %s182 = scalar_lea.hbm %s1, %s181
          %s183 = sshll.u32 %s182, 4
          %s184 = int_to_ptr.hbm [resolvable:$true] %s183
          %s185 = sshll.u32 [#allocation6], 4
          %s186 = int_to_ptr.vmem [resolvable:$true] %s185
          %191 = dma.hbm_to_vmem [thread:$0]  %s184, 4096, %s186, [#allocation7], 256, 256, 16
        $region16: #{tpu_custom_call.1} parent=11 // pred_fallthru
          _
        // Predicated region
        $region17: #{tpu_custom_call.1} parent=11 // pred_check
          %p192 = pneg %p108
        $region18: #{tpu_custom_call.1} parent=11 // pred_check_branch
          %194 = sbr.rel (%p192) target = $region20
        $region19: #{tpu_custom_call.1} parent=11 // pred_region
          %s195 = smul.u32 2, %s28
          %197 = vsyncadd [#allocation7], 0
          %s198 = smul.addr %s195, 8
          %s199 = scalar_lea.hbm %s2, %s198
          %s200 = sshll.u32 %s199, 4
          %s201 = int_to_ptr.hbm [resolvable:$true] %s200
          %s202 = sshll.u32 [#allocation8], 4
          %s203 = int_to_ptr.vmem [resolvable:$true] %s202
          %208 = dma.hbm_to_vmem [thread:$0]  %s201, 4096, %s203, [#allocation7], 256, 256, 16
        $region20: #{tpu_custom_call.1} parent=11 // pred_fallthru
          _
        // Predicated region
        $region21: #{tpu_custom_call.1} parent=11 // pred_check
          %p209 = pneg %p134
        $region22: #{tpu_custom_call.1} parent=11 // pred_check_branch
          %211 = sbr.rel (%p209) target = $region24
        $region23: #{tpu_custom_call.1} parent=11 // pred_region
          %s212 = smul.u32 32, %s28
          %214 = vsyncadd [#allocation10], 0
          %s215 = smul.addr %s212, 8
          %s216 = scalar_lea.hbm %s3, %s215
          %s217 = sshll.u32 %s216, 4
          %s218 = int_to_ptr.hbm [resolvable:$true] %s217
          %s219 = sshll.u32 [#allocation9], 4
          %s220 = int_to_ptr.vmem [resolvable:$true] %s219
          %225 = dma.hbm_to_vmem [thread:$0]  %s218, 4096, %s220, [#allocation10], 128, 128, 8
        $region24: #{tpu_custom_call.1} parent=11 // pred_fallthru
          _
      $region12: #{tpu_custom_call.1} parent=5 // pred_fallthru
        _
      %p226 = scmp.lt.s32.totalorder %s18, 2
      // Predicated region
      $region25: #{tpu_custom_call.1} parent=5 // pred_check
        %p227 = pneg %p226
      $region26: #{tpu_custom_call.1} parent=5 // pred_check_branch
        %229 = sbr.rel (%p227) target = $region28
      $region27: #{tpu_custom_call.1} parent=5 // pred_region
        // Predicated region
        $region29: #{tpu_custom_call.1} parent=27 // pred_check
          %p230 = pneg %p50
        $region30: #{tpu_custom_call.1} parent=27 // pred_check_branch
          %232 = sbr.rel (%p230) target = $region32
        $region31: #{tpu_custom_call.1} parent=27 // pred_region
          %s233 = sand.u32 %s40, 1
          %s234 = scalar_lea.sflag [#allocation4], %s233
          %s235 = sand.u32 %s40, 1
          %s236 = smul.addr %s235, 8
          %s237 = scalar_lea.vmem [#allocation3], %s236
          %239 = vsyncadd %s234, 0
          %s240 = smul.addr %s25, 8
          %s241 = scalar_lea.hbm %s0, %s240
          %s243 = sshll.u32 %s241, 4
          %s244 = int_to_ptr.hbm [resolvable:$true] %s243
          %s245 = sshll.u32 %s237, 4
          %s246 = int_to_ptr.vmem [resolvable:$true] %s245
          %248 = dma.hbm_to_vmem [thread:$0]  %s244, 128, %s246, %s234
        $region32: #{tpu_custom_call.1} parent=27 // pred_fallthru
          _
      $region28: #{tpu_custom_call.1} parent=5 // pred_fallthru
        _
      %p249 = scmp.le.s32.totalorder 1, %s18
      %p250 = scmp.lt.s32.totalorder %s18, 3
      %p251 = pnand %p249, %p250
      %p252 = pneg %p251
      // Predicated region
      $region33: #{tpu_custom_call.1} parent=5 // pred_check
        _
      $region34: #{tpu_custom_call.1} parent=5 // pred_check_branch
        %254 = sbr.rel (%p251) target = $region36
      $region35: #{tpu_custom_call.1} parent=5 // pred_region
        %s255 = ssub.s32 %s18, 1
        %s256 = sand.u32 %s43, 1
        %s257 = scalar_lea.sflag [#allocation4], %s256
        %s258 = sand.u32 %s43, 1
        %s259 = smul.addr %s258, 8
        %s260 = scalar_lea.vmem [#allocation3], %s259
        // Predicated region
        $region37: #{tpu_custom_call.1} parent=35 // pred_check
          %p261 = pneg %p56
        $region38: #{tpu_custom_call.1} parent=35 // pred_check_branch
          %263 = sbr.rel (%p261) target = $region40
        $region39: #{tpu_custom_call.1} parent=35 // pred_region
          %265 = dma.done %s257, 128
        $region40: #{tpu_custom_call.1} parent=35 // pred_fallthru
          _
        // Predicated region
        $region41: #{tpu_custom_call.1} parent=35 // pred_check
          %p266 = pneg %p82
        $region42: #{tpu_custom_call.1} parent=35 // pred_check_branch
          %268 = sbr.rel (%p266) target = $region44
        $region43: #{tpu_custom_call.1} parent=35 // pred_region
          %270 = dma.done [#allocation7], 4096
        $region44: #{tpu_custom_call.1} parent=35 // pred_fallthru
          _
        // Predicated region
        $region45: #{tpu_custom_call.1} parent=35 // pred_check
          %p271 = pneg %p108
        $region46: #{tpu_custom_call.1} parent=35 // pred_check_branch
          %273 = sbr.rel (%p271) target = $region48
        $region47: #{tpu_custom_call.1} parent=35 // pred_region
          %275 = dma.done [#allocation7], 4096
        $region48: #{tpu_custom_call.1} parent=35 // pred_fallthru
          _
        // Predicated region
        $region49: #{tpu_custom_call.1} parent=35 // pred_check
          %p276 = pneg %p134
        $region50: #{tpu_custom_call.1} parent=35 // pred_check_branch
          %278 = sbr.rel (%p276) target = $region52
        $region51: #{tpu_custom_call.1} parent=35 // pred_region
          %280 = dma.done [#allocation10], 4096
        $region52: #{tpu_custom_call.1} parent=35 // pred_fallthru
          _
        %s281 = sand.u32 %s43, 1
        %s282 = scalar_lea.sflag [#allocation4], %s281
        %s283 = sand.u32 %s43, 1
        %s284 = smul.addr %s283, 8
        %s285 = scalar_lea.vmem [#allocation3], %s284
        %p286 = pneg %p56
        %p287 = pneg %p53
        %p288 = pneg %p82
        %p289 = pneg %p79
        %p290 = pneg %p108
        %p291 = pneg %p105
        %p292 = pneg %p134
        %p293 = pneg %p131
        %p294 = pneg %p160
        %p295 = pneg %p157
        %s296 = sand.u32 %s147, 1
        %s297 = scalar_lea.sflag [#allocation5], %s296
        %s298 = sand.u32 %s147, 1
        %s299 = smul.addr %s298, 8
        %s300 = scalar_lea.vmem [#allocation11], %s299
        %s301 = smul.u32 2, %s28
        %s302 = smul.u32 2, %s28
        %s303 = smul.u32 32, %s28
        %p304 = scmp.eq.s32.totalorder %s28, 0
        // Predicated region
        $region53: #{tpu_custom_call.1} parent=35 // pred_check
          %p305 = pneg %p304
        $region54: #{tpu_custom_call.1} parent=35 // pred_check_branch
          %307 = sbr.rel (%p305) target = $region56
        $region55: #{tpu_custom_call.1} parent=35 // pred_region
          %308 = vst [vmem:[#allocation2] sm:$0xff] 0.0
        $region56: #{tpu_custom_call.1} parent=35 // pred_fallthru
          _
        %v309 = vld [vmem:[%s260] sm:$0xff]
        %v310 = vld [vmem:[#allocation6] sm:$0xff]
        %v311 = vld [vmem:[#allocation6 + $0x8] sm:$0xff]
        %v312 = vld [vmem:[#allocation6 + $0x10] sm:$0xff]
        %v313 = vld [vmem:[#allocation6 + $0x18] sm:$0xff]
        %v314 = vld [vmem:[#allocation6 + $0x20] sm:$0xff]
        %v315 = vld [vmem:[#allocation6 + $0x28] sm:$0xff]
        %v316 = vld [vmem:[#allocation6 + $0x30] sm:$0xff]
        %v317 = vld [vmem:[#allocation6 + $0x38] sm:$0xff]
        %v318 = vld [vmem:[#allocation6 + $0x40] sm:$0xff]
        %v319 = vld [vmem:[#allocation6 + $0x48] sm:$0xff]
        %v320 = vld [vmem:[#allocation6 + $0x50] sm:$0xff]
        %v321 = vld [vmem:[#allocation6 + $0x58] sm:$0xff]
        %v322 = vld [vmem:[#allocation6 + $0x60] sm:$0xff]
        %v323 = vld [vmem:[#allocation6 + $0x68] sm:$0xff]
        %v324 = vld [vmem:[#allocation6 + $0x70] sm:$0xff]
        %v325 = vld [vmem:[#allocation6 + $0x78] sm:$0xff]
        %v326 = vld [vmem:[#allocation6 + $0x80] sm:$0xff]
        %v327 = vld [vmem:[#allocation6 + $0x88] sm:$0xff]
        %v328 = vld [vmem:[#allocation6 + $0x90] sm:$0xff]
        %v329 = vld [vmem:[#allocation6 + $0x98] sm:$0xff]
        %v330 = vld [vmem:[#allocation6 + $0xa0] sm:$0xff]
        %v331 = vld [vmem:[#allocation6 + $0xa8] sm:$0xff]
        %v332 = vld [vmem:[#allocation6 + $0xb0] sm:$0xff]
        %v333 = vld [vmem:[#allocation6 + $0xb8] sm:$0xff]
        %v334 = vld [vmem:[#allocation6 + $0xc0] sm:$0xff]
        %v335 = vld [vmem:[#allocation6 + $0xc8] sm:$0xff]
        %v336 = vld [vmem:[#allocation6 + $0xd0] sm:$0xff]
        %v337 = vld [vmem:[#allocation6 + $0xd8] sm:$0xff]
        %v338 = vld [vmem:[#allocation6 + $0xe0] sm:$0xff]
        %v339 = vld [vmem:[#allocation6 + $0xe8] sm:$0xff]
        %v340 = vld [vmem:[#allocation6 + $0xf0] sm:$0xff]
        %v341 = vld [vmem:[#allocation6 + $0xf8] sm:$0xff]
        %342 = vmatpush.msra.mxu0 %v340
        %343 = vmatpush.msra.mxu0 %v338
        %344 = vmatpush.msra.mxu0 %v336
        %345 = vmatpush.msra.mxu0 %v334
        %346 = vmatpush.msra.mxu0 %v332
        %347 = vmatpush.msra.mxu0 %v330
        %348 = vmatpush.msra.mxu0 %v328
        %349 = vmatpush.msra.mxu0 %v326
        %350 = vmatpush.msra.mxu0 %v324
        %351 = vmatpush.msra.mxu0 %v322
        %352 = vmatpush.msra.mxu0 %v320
        %353 = vmatpush.msra.mxu0 %v318
        %354 = vmatpush.msra.mxu0 %v316
        %355 = vmatpush.msra.mxu0 %v314
        %356 = vmatpush.msra.mxu0 %v312
        %357 = vmatpush.msra.mxu0 %v310
        %358 = vmatmul.f32.gmra.mxu0 %v309
        %v359 = vpop.f32.mrf.mxu0
        %v360 = vadd.f32 0.0, %v359
        %361 = vdwg.mxu0
        %362 = vmatpush.msra.mxu0 %v341
        %363 = vmatpush.msra.mxu0 %v339
        %364 = vmatpush.msra.mxu0 %v337
        %365 = vmatpush.msra.mxu0 %v335
        %366 = vmatpush.msra.mxu0 %v333
        %367 = vmatpush.msra.mxu0 %v331
        %368 = vmatpush.msra.mxu0 %v329
        %369 = vmatpush.msra.mxu0 %v327
        %370 = vmatpush.msra.mxu0 %v325
        %371 = vmatpush.msra.mxu0 %v323
        %372 = vmatpush.msra.mxu0 %v321
        %373 = vmatpush.msra.mxu0 %v319
        %374 = vmatpush.msra.mxu0 %v317
        %375 = vmatpush.msra.mxu0 %v315
        %376 = vmatpush.msra.mxu0 %v313
        %377 = vmatpush.msra.mxu0 %v311
        %378 = vmatmul.f32.gmra.mxu0 %v309
        %v379 = vpop.f32.mrf.mxu0
        %v380 = vadd.f32 0.0, %v379
        %381 = vdwg.mxu0
        %v382 = vld [vmem:[#allocation8] sm:$0xff]
        %v383 = vld [vmem:[#allocation8 + $0x8] sm:$0xff]
        %v384 = vld [vmem:[#allocation8 + $0x10] sm:$0xff]
        %v385 = vld [vmem:[#allocation8 + $0x18] sm:$0xff]
        %v386 = vld [vmem:[#allocation8 + $0x20] sm:$0xff]
        %v387 = vld [vmem:[#allocation8 + $0x28] sm:$0xff]
        %v388 = vld [vmem:[#allocation8 + $0x30] sm:$0xff]
        %v389 = vld [vmem:[#allocation8 + $0x38] sm:$0xff]
        %v390 = vld [vmem:[#allocation8 + $0x40] sm:$0xff]
        %v391 = vld [vmem:[#allocation8 + $0x48] sm:$0xff]
        %v392 = vld [vmem:[#allocation8 + $0x50] sm:$0xff]
        %v393 = vld [vmem:[#allocation8 + $0x58] sm:$0xff]
        %v394 = vld [vmem:[#allocation8 + $0x60] sm:$0xff]
        %v395 = vld [vmem:[#allocation8 + $0x68] sm:$0xff]
        %v396 = vld [vmem:[#allocation8 + $0x70] sm:$0xff]
        %v397 = vld [vmem:[#allocation8 + $0x78] sm:$0xff]
        %v398 = vld [vmem:[#allocation8 + $0x80] sm:$0xff]
        %v399 = vld [vmem:[#allocation8 + $0x88] sm:$0xff]
        %v400 = vld [vmem:[#allocation8 + $0x90] sm:$0xff]
        %v401 = vld [vmem:[#allocation8 + $0x98] sm:$0xff]
        %v402 = vld [vmem:[#allocation8 + $0xa0] sm:$0xff]
        %v403 = vld [vmem:[#allocation8 + $0xa8] sm:$0xff]
        %v404 = vld [vmem:[#allocation8 + $0xb0] sm:$0xff]
        %v405 = vld [vmem:[#allocation8 + $0xb8] sm:$0xff]
        %v406 = vld [vmem:[#allocation8 + $0xc0] sm:$0xff]
        %v407 = vld [vmem:[#allocation8 + $0xc8] sm:$0xff]
        %v408 = vld [vmem:[#allocation8 + $0xd0] sm:$0xff]
        %v409 = vld [vmem:[#allocation8 + $0xd8] sm:$0xff]
        %v410 = vld [vmem:[#allocation8 + $0xe0] sm:$0xff]
        %v411 = vld [vmem:[#allocation8 + $0xe8] sm:$0xff]
        %v412 = vld [vmem:[#allocation8 + $0xf0] sm:$0xff]
        %v413 = vld [vmem:[#allocation8 + $0xf8] sm:$0xff]
        %414 = vmatpush.msra.mxu0 %v412
        %415 = vmatpush.msra.mxu0 %v410
        %416 = vmatpush.msra.mxu0 %v408
        %417 = vmatpush.msra.mxu0 %v406
        %418 = vmatpush.msra.mxu0 %v404
        %419 = vmatpush.msra.mxu0 %v402
        %420 = vmatpush.msra.mxu0 %v400
        %421 = vmatpush.msra.mxu0 %v398
        %422 = vmatpush.msra.mxu0 %v396
        %423 = vmatpush.msra.mxu0 %v394
        %424 = vmatpush.msra.mxu0 %v392
        %425 = vmatpush.msra.mxu0 %v390
        %426 = vmatpush.msra.mxu0 %v388
        %427 = vmatpush.msra.mxu0 %v386
        %428 = vmatpush.msra.mxu0 %v384
        %429 = vmatpush.msra.mxu0 %v382
        %430 = vmatmul.f32.gmra.mxu0 %v309
        %v431 = vpop.f32.mrf.mxu0
        %v432 = vadd.f32 0.0, %v431
        %433 = vdwg.mxu0
        %434 = vmatpush.msra.mxu0 %v413
        %435 = vmatpush.msra.mxu0 %v411
        %436 = vmatpush.msra.mxu0 %v409
        %437 = vmatpush.msra.mxu0 %v407
        %438 = vmatpush.msra.mxu0 %v405
        %439 = vmatpush.msra.mxu0 %v403
        %440 = vmatpush.msra.mxu0 %v401
        %441 = vmatpush.msra.mxu0 %v399
        %442 = vmatpush.msra.mxu0 %v397
        %443 = vmatpush.msra.mxu0 %v395
        %444 = vmatpush.msra.mxu0 %v393
        %445 = vmatpush.msra.mxu0 %v391
        %446 = vmatpush.msra.mxu0 %v389
        %447 = vmatpush.msra.mxu0 %v387
        %448 = vmatpush.msra.mxu0 %v385
        %449 = vmatpush.msra.mxu0 %v383
        %450 = vmatmul.f32.gmra.mxu0 %v309
        %v451 = vpop.f32.mrf.mxu0
        %v452 = vadd.f32 0.0, %v451
        %453 = vdwg.mxu0
        %v454 = vxor.u32 %v360, 2147483648
        %v455 = vxor.u32 %v380, 2147483648
        %v456 = vmul.f32 %v454, 1.442695
        %v457 = vpow.pop %v456
        %v458 = vmul.f32 %v455, 1.442695
        %v459 = vpow.pop %v458
        %v460 = vadd.f32 %v457, 1.0
        %v461 = vadd.f32 %v459, 1.0
        %v462 = vrcp.pop %v460
        %v463 = vmul.f32 %v460, %v462
        %v464 = vsub.f32 1.0, %v463
        %v465 = vmul.f32 %v462, %v464
        %v466 = vadd.f32 %v462, %v465
        %vm467 = vweird.f32 %v460
        %vm468 = vweird.f32 %v462
        %vm469 = vmor %vm467, %vm468
        %v470 = vsel %vm469, %v462, %v466
        %v471 = vand.u32 2147483647, %v460
        %vm472 = vcmp.eq.f32.partialorder %v471, 8.507059e+37
        %v473 = vand.u32 %v460, 2147483648
        %v474 = vor.u32 1.1754944e-38, %v473
        %v475 = vsel %vm472, %v474, %v470
        %v476 = vmul.f32 1.0, %v475
        %v477 = vrcp.pop %v461
        %v478 = vmul.f32 %v461, %v477
        %v479 = vsub.f32 1.0, %v478
        %v480 = vmul.f32 %v477, %v479
        %v481 = vadd.f32 %v477, %v480
        %vm482 = vweird.f32 %v461
        %vm483 = vweird.f32 %v477
        %vm484 = vmor %vm482, %vm483
        %v485 = vsel %vm484, %v477, %v481
        %v486 = vand.u32 2147483647, %v461
        %vm487 = vcmp.eq.f32.partialorder %v486, 8.507059e+37
        %v488 = vand.u32 %v461, 2147483648
        %v489 = vor.u32 1.1754944e-38, %v488
        %v490 = vsel %vm487, %v489, %v485
        %v491 = vmul.f32 1.0, %v490
        %v492 = vmul.f32 %v360, %v476
        %v493 = vmul.f32 %v380, %v491
        %v494 = vmul.f32 %v432, %v492
        %v495 = vmul.f32 %v452, %v493
        %v496 = vld [vmem:[#allocation2] sm:$0xff]
        %v497 = vld [vmem:[#allocation9] sm:$0xff]
        %v498 = vld [vmem:[#allocation9 + $0x8] sm:$0xff]
        %v499 = vld [vmem:[#allocation9 + $0x10] sm:$0xff]
        %v500 = vld [vmem:[#allocation9 + $0x18] sm:$0xff]
        %v501 = vld [vmem:[#allocation9 + $0x20] sm:$0xff]
        %v502 = vld [vmem:[#allocation9 + $0x28] sm:$0xff]
        %v503 = vld [vmem:[#allocation9 + $0x30] sm:$0xff]
        %v504 = vld [vmem:[#allocation9 + $0x38] sm:$0xff]
        %v505 = vld [vmem:[#allocation9 + $0x40] sm:$0xff]
        %v506 = vld [vmem:[#allocation9 + $0x48] sm:$0xff]
        %v507 = vld [vmem:[#allocation9 + $0x50] sm:$0xff]
        %v508 = vld [vmem:[#allocation9 + $0x58] sm:$0xff]
        %v509 = vld [vmem:[#allocation9 + $0x60] sm:$0xff]
        %v510 = vld [vmem:[#allocation9 + $0x68] sm:$0xff]
        %v511 = vld [vmem:[#allocation9 + $0x70] sm:$0xff]
        %v512 = vld [vmem:[#allocation9 + $0x78] sm:$0xff]
        %v513 = vld [vmem:[#allocation9 + $0x80] sm:$0xff]
        %v514 = vld [vmem:[#allocation9 + $0x88] sm:$0xff]
        %v515 = vld [vmem:[#allocation9 + $0x90] sm:$0xff]
        %v516 = vld [vmem:[#allocation9 + $0x98] sm:$0xff]
        %v517 = vld [vmem:[#allocation9 + $0xa0] sm:$0xff]
        %v518 = vld [vmem:[#allocation9 + $0xa8] sm:$0xff]
        %v519 = vld [vmem:[#allocation9 + $0xb0] sm:$0xff]
        %v520 = vld [vmem:[#allocation9 + $0xb8] sm:$0xff]
        %v521 = vld [vmem:[#allocation9 + $0xc0] sm:$0xff]
        %v522 = vld [vmem:[#allocation9 + $0xc8] sm:$0xff]
        %v523 = vld [vmem:[#allocation9 + $0xd0] sm:$0xff]
        %v524 = vld [vmem:[#allocation9 + $0xd8] sm:$0xff]
        %v525 = vld [vmem:[#allocation9 + $0xe0] sm:$0xff]
        %v526 = vld [vmem:[#allocation9 + $0xe8] sm:$0xff]
        %v527 = vld [vmem:[#allocation9 + $0xf0] sm:$0xff]
        %v528 = vld [vmem:[#allocation9 + $0xf8] sm:$0xff]
        %529 = vmatpush.msra.mxu0 %v512
        %530 = vmatpush.msra.mxu0 %v511
        %531 = vmatpush.msra.mxu0 %v510
        %532 = vmatpush.msra.mxu0 %v509
        %533 = vmatpush.msra.mxu0 %v508
        %534 = vmatpush.msra.mxu0 %v507
        %535 = vmatpush.msra.mxu0 %v506
        %536 = vmatpush.msra.mxu0 %v505
        %537 = vmatpush.msra.mxu0 %v504
        %538 = vmatpush.msra.mxu0 %v503
        %539 = vmatpush.msra.mxu0 %v502
        %540 = vmatpush.msra.mxu0 %v501
        %541 = vmatpush.msra.mxu0 %v500
        %542 = vmatpush.msra.mxu0 %v499
        %543 = vmatpush.msra.mxu0 %v498
        %544 = vmatpush.msra.mxu0 %v497
        %545 = vmatmul.f32.gmra.mxu0 %v494
        %v546 = vpop.f32.mrf.mxu0
        %v547 = vadd.f32 0.0, %v546
        %548 = vdwg.mxu0
        %549 = vmatpush.msra.mxu0 %v528
        %550 = vmatpush.msra.mxu0 %v527
        %551 = vmatpush.msra.mxu0 %v526
        %552 = vmatpush.msra.mxu0 %v525
        %553 = vmatpush.msra.mxu0 %v524
        %554 = vmatpush.msra.mxu0 %v523
        %555 = vmatpush.msra.mxu0 %v522
        %556 = vmatpush.msra.mxu0 %v521
        %557 = vmatpush.msra.mxu0 %v520
        %558 = vmatpush.msra.mxu0 %v519
        %559 = vmatpush.msra.mxu0 %v518
        %560 = vmatpush.msra.mxu0 %v517
        %561 = vmatpush.msra.mxu0 %v516
        %562 = vmatpush.msra.mxu0 %v515
        %563 = vmatpush.msra.mxu0 %v514
        %564 = vmatpush.msra.mxu0 %v513
        %565 = vmatmul.f32.gmra.mxu0 %v495
        %v566 = vpop.f32.mrf.mxu0
        %v567 = vadd.f32 %v547, %v566
        %568 = vdwg.mxu0
        %v569 = vadd.f32 %v496, %v567
        %570 = vst [vmem:[#allocation2] sm:$0xff] %v569
        // Predicated region
        $region57: #{tpu_custom_call.1} parent=35 // pred_check
          %p571 = pneg %p304
        $region58: #{tpu_custom_call.1} parent=35 // pred_check_branch
          %573 = sbr.rel (%p571) target = $region60
        $region59: #{tpu_custom_call.1} parent=35 // pred_region
          %v574 = vld [vmem:[#allocation2] sm:$0xff]
          %575 = vst [vmem:[%s300] sm:$0xff] %v574
        $region60: #{tpu_custom_call.1} parent=35 // pred_fallthru
          _
        %s576 = sand.u32 %s147, 1
        %s577 = scalar_lea.sflag [#allocation5], %s576
        %s578 = sand.u32 %s147, 1
        %s579 = smul.addr %s578, 8
        %s580 = scalar_lea.vmem [#allocation11], %s579
        // Predicated region
        $region61: #{tpu_custom_call.1} parent=35 // pred_check
          %p581 = pneg %p157
        $region62: #{tpu_custom_call.1} parent=35 // pred_check_branch
          %583 = sbr.rel (%p581) target = $region64
        $region63: #{tpu_custom_call.1} parent=35 // pred_region
          %585 = vsyncadd %s577, 0
          %s586 = smul.addr %s27, 8
          %s587 = scalar_lea.hbm %s4, %s586
          %s589 = sshll.u32 %s580, 4
          %s590 = int_to_ptr.vmem [resolvable:$true] %s589
          %s591 = sshll.u32 %s587, 4
          %s592 = int_to_ptr.hbm [resolvable:$true] %s591
          %594 = dma.vmem_to_hbm [thread:$0]  %s590, 128, %s592, %s577
        $region64: #{tpu_custom_call.1} parent=35 // pred_fallthru
          _
      $region36: #{tpu_custom_call.1} parent=5 // pred_fallthru
        _
      %p595 = scmp.le.s32.totalorder 2, %s18
      // Predicated region
      $region65: #{tpu_custom_call.1} parent=5 // pred_check
        %p596 = pneg %p595
      $region66: #{tpu_custom_call.1} parent=5 // pred_check_branch
        %598 = sbr.rel (%p596) target = $region68
      $region67: #{tpu_custom_call.1} parent=5 // pred_region
        %s599 = ssub.s32 %s18, 2
        // Predicated region
        $region69: #{tpu_custom_call.1} parent=67 // pred_check
          %p600 = pneg %p163
        $region70: #{tpu_custom_call.1} parent=67 // pred_check_branch
          %602 = sbr.rel (%p600) target = $region72
        $region71: #{tpu_custom_call.1} parent=67 // pred_region
          %s603 = sand.u32 %s148, 1
          %s604 = scalar_lea.sflag [#allocation5], %s603
          %s605 = sand.u32 %s148, 1
          %s606 = smul.addr %s605, 8
          %s607 = scalar_lea.vmem [#allocation11], %s606
          %609 = dma.done %s604, 128
        $region72: #{tpu_custom_call.1} parent=67 // pred_fallthru
          _
      $region68: #{tpu_custom_call.1} parent=5 // pred_fallthru
        _
    $region6: #{tpu_custom_call.1} parent=1 // loop_footer
      %s22 = sadd.s32 1, %s18
    $region7: #{tpu_custom_call.1} parent=1 // loop_footer_branch
      %17 = sbr.rel target = $region3
    $region8: #{tpu_custom_call.1} parent=1 // loop_exit
      _
    %610 = vsyncpa [#allocation4], 1
    %s611 = scalar_lea.sflag [#allocation4], 1
    %612 = vsyncpa %s611, 1
    %613 = vsyncpa [#allocation7], 1
    %614 = vsyncpa [#allocation10], 1
    %615 = vsyncpa [#allocation5], 1
    %s616 = scalar_lea.sflag [#allocation5], 1
    %617 = vsyncpa %s616, 1

</llo_original>
